<compile_context>
chip_gen: v6e
topology: v6e:2x2x1
jax: 0.10.0
libtpu: 0.0.40
codegen_flags: <defaults>
</compile_context>

<pallas_src>
import math
from functools import partial

import jax
import jax.numpy as jnp
from jax.experimental import pallas as pl
from jax.experimental.pallas import tpu as pltpu


def _round_up(x, m):
    return (x + m - 1) // m * m


def bottom_embedding_kernel(ids_ref, tab_ref, pos_ref, out_ref):
    """One row-tile of the fused embedding lookup.

    ids_ref : [TM, 3]        int32  ids already offset into the fused row space
    tab_ref : [V_pad, D_pad] bf16   block-diagonal opcode/op1/op2 table (resident)
    pos_ref : [TM, D_pad]    f32    positional slab, identical for every tile (resident)
    out_ref : [TM, D_pad]    f32
    """
    tm = out_ref.shape[0]
    v = tab_ref.shape[0]
    ids = ids_ref[...]                                       # single [TM, 3] load
    col = jax.lax.broadcasted_iota(jnp.int32, (tm, v), 1)
    # Boolean one-hot with 3 ones per row (row ranges are disjoint by construction);
    # cast exactly once, right before the dot.
    oh = ((col == ids[:, 0:1]) |
          (col == ids[:, 1:2]) |
          (col == ids[:, 2:3]))
    out_ref[...] = jnp.dot(oh.astype(jnp.bfloat16), tab_ref[...],
                           preferred_element_type=jnp.float32) + pos_ref[...]


def prepare_fused_table(opc_tab, op1_tab, op2_tab):
    """Build the block-diagonal [V_pad, d_pad] bf16 table ONCE for fixed weights.

    opcode rows   -> cols [0, per_dim)
    operand1 rows -> cols [per_dim, 2*per_dim)
    operand2 rows -> cols [2*per_dim, 3*per_dim)
    """
    opcode_size, per_dim = opc_tab.shape
    operand_size = op1_tab.shape[0]
    d_model = 3 * per_dim
    vocab = opcode_size + 2 * operand_size
    v_pad = _round_up(vocab, 128)            # aligned MXU contraction dim
    d_pad = _round_up(d_model, 128)          # lane-dense, unmasked output stores
    tab = jnp.zeros((v_pad, d_pad), jnp.float32)
    tab = tab.at[:opcode_size, :per_dim].set(opc_tab)
    tab = tab.at[opcode_size:opcode_size + operand_size,
                 per_dim:2 * per_dim].set(op1_tab)
    tab = tab.at[opcode_size + operand_size:vocab,
                 2 * per_dim:3 * per_dim].set(op2_tab)
    return tab.astype(jnp.bfloat16)


@partial(jax.jit,
         static_argnames=("opcode_size", "operand_size", "d_model", "tm_target"))
def bottom_embedding(batch, fused_tab, pos_tab, *,
                     opcode_size, operand_size, d_model, tm_target=256):
    """batch: [B, L, 3] integer ids -> [B, L, d_model] f32."""
    B, L, _ = batch.shape
    v_pad, d_pad = fused_tab.shape
    n = B * L

    # Row-tile size: multiple of lcm(L, 8) so (a) every tile's positional pattern
    # is identical and (b) the sublane constraint holds; capped near tm_target and
    # at the (padded) problem size.
    unit = (L * 8) // math.gcd(L, 8)
    tm = unit * max(1, tm_target // unit)
    tm = min(tm, _round_up(n, unit))
    n_pad = _round_up(n, tm)
    grid = n_pad // tm

    # Single packed index stream: [n_pad, 3] int32, ids offset into the fused
    # table's row space.  Padded rows get an out-of-range id -> zero contribution.
    offs = jnp.array([0, opcode_size, opcode_size + operand_size], jnp.int32)
    ids = batch.reshape(n, 3).astype(jnp.int32) + offs[None, :]
    ids = jnp.pad(ids, ((0, n_pad - n), (0, 0)), constant_values=v_pad)

    # Small resident positional slab [tm, d_pad]; row j holds pos[j % L].
    pos_slab = jnp.zeros((tm, d_pad), jnp.float32)
    pos_slab = pos_slab.at[:, :d_model].set(jnp.tile(pos_tab[:L], (tm // L, 1)))

    out_flat = pl.pallas_call(
        bottom_embedding_kernel,
        out_shape=jax.ShapeDtypeStruct((n_pad, d_pad), jnp.float32),
        grid=(grid,),
        in_specs=[
            pl.BlockSpec((tm, 3), lambda i: (i, 0)),          # row-tiled ids
            pl.BlockSpec((v_pad, d_pad), lambda i: (0, 0)),   # resident fused table
            pl.BlockSpec((tm, d_pad), lambda i: (0, 0)),      # resident pos slab
        ],
        out_specs=pl.BlockSpec((tm, d_pad), lambda i: (i, 0)),
        compiler_params=pltpu.CompilerParams(
            dimension_semantics=("parallel",)),               # megacore row split
    )(ids, fused_tab, pos_slab)

    # No-op (elided by XLA) when d_model % 128 == 0 and B*L % tm == 0.
    return out_flat[:n, :d_model].reshape(B, L, d_model)


if __name__ == "__main__":
    # Small, module-consistent sizes.
    B, L = 4, 8
    opcode_size, operand_size = 32, 16
    d_model = 48                      # must be a multiple of 3
    per_dim = d_model // 3
    max_length = 16
    # padding_idx is accepted by the PyTorch module but never used -> ignored.

    key = jax.random.PRNGKey(0)
    k_op, k_o1, k_o2, k_pos, k_i1, k_i2 = jax.random.split(key, 6)

    # nn.Embedding default init: N(0, 1)
    opc_tab = jax.random.normal(k_op, (opcode_size, per_dim), dtype=jnp.float32)
    op1_tab = jax.random.normal(k_o1, (operand_size, per_dim), dtype=jnp.float32)
    op2_tab = jax.random.normal(k_o2, (operand_size, per_dim), dtype=jnp.float32)
    pos_tab = jax.random.normal(k_pos, (max_length, d_model), dtype=jnp.float32)

    opcode_ids = jax.random.randint(k_i1, (B, L, 1), 0, opcode_size, dtype=jnp.int32)
    operand_ids = jax.random.randint(k_i2, (B, L, 2), 0, operand_size, dtype=jnp.int32)
    batch = jnp.concatenate([opcode_ids, operand_ids], axis=-1)   # [B, L, 3]

    # Fused table built once (hoisted out of the jitted forward).
    fused_tab = jax.block_until_ready(prepare_fused_table(opc_tab, op1_tab, op2_tab))

    # tm_target=16 -> tile of 16 rows, 2 grid steps: exercises the row pipeline.
    out = jax.block_until_ready(
        bottom_embedding(batch, fused_tab, pos_tab,
                         opcode_size=opcode_size, operand_size=operand_size,
                         d_model=d_model, tm_target=16))

    # References: exact vs bf16-quantized tables (kernel path), loose vs pure f32.
    q = lambda t: t.astype(jnp.bfloat16).astype(jnp.float32)
    ref_f32 = jnp.concatenate(
        [jnp.take(opc_tab, batch[:, :, 0], axis=0),
         jnp.take(op1_tab, batch[:, :, 1], axis=0),
         jnp.take(op2_tab, batch[:, :, 2], axis=0)], axis=-1) + pos_tab[:L][None]
    ref_bf16 = jnp.concatenate(
        [jnp.take(q(opc_tab), batch[:, :, 0], axis=0),
         jnp.take(q(op1_tab), batch[:, :, 1], axis=0),
         jnp.take(q(op2_tab), batch[:, :, 2], axis=0)], axis=-1) + pos_tab[:L][None]

    assert out.shape == (B, L, d_model)
    assert jnp.allclose(out, ref_bf16, atol=1e-4), "mismatch vs bf16-table reference"
    assert jnp.allclose(out, ref_f32, atol=3e-2, rtol=3e-2), "mismatch vs f32 reference"

    print("KERNEL_OK")
</pallas_src>

<mosaic_0001>
module attributes {stable_mosaic.version = 11 : i64} {
  func.func @bottom_embedding_kernel(%arg0: i32, %arg1: memref<16x3xi32, #tpu.memory_space<vmem>>, %arg2: memref<128x128xbf16, #tpu.memory_space<vmem>>, %arg3: memref<16x128xf32, #tpu.memory_space<vmem>>, %arg4: memref<16x128xf32, #tpu.memory_space<vmem>>) attributes {dimension_semantics = [#tpu.dimension_semantics<parallel>], iteration_bounds = array<i64: 2>, scalar_prefetch = 0 : i64, scratch_operands = 0 : i64, tpu.core_type = #tpu.core_type<tc>, window_params = [{transform_indices = @transform_0, window_bounds = array<i64: 16, 3>}, {pipeline_mode = #tpu.pipeline_mode<synchronous>, transform_indices = @transform_1, window_bounds = array<i64: 128, 128>}, {pipeline_mode = #tpu.pipeline_mode<synchronous>, transform_indices = @transform_2, window_bounds = array<i64: 16, 128>}, {transform_indices = @transform_3, window_bounds = array<i64: 16, 128>}]} {
    %c0 = arith.constant 0 : index
    %c0_0 = arith.constant 0 : index
    %0 = vector.load %arg1[%c0, %c0_0] : memref<16x3xi32, #tpu.memory_space<vmem>>, vector<16x3xi32>
    %1 = tpu.iota {dimensions = array<i32: 1>} : vector<16x128xi32>
    %2 = vector.extract_strided_slice %0 {offsets = [0, 0], sizes = [16, 1], strides = [1, 1]} : vector<16x3xi32> to vector<16x1xi32>
    %3 = vector.broadcast %2 : vector<16x1xi32> to vector<16x128xi32>
    %4 = arith.cmpi eq, %1, %3 : vector<16x128xi32>
    %5 = vector.extract_strided_slice %0 {offsets = [0, 1], sizes = [16, 1], strides = [1, 1]} : vector<16x3xi32> to vector<16x1xi32>
    %6 = vector.broadcast %5 : vector<16x1xi32> to vector<16x128xi32>
    %7 = arith.cmpi eq, %1, %6 : vector<16x128xi32>
    %8 = arith.ori %4, %7 : vector<16x128xi1>
    %9 = vector.extract_strided_slice %0 {offsets = [0, 2], sizes = [16, 1], strides = [1, 1]} : vector<16x3xi32> to vector<16x1xi32>
    %10 = vector.broadcast %9 : vector<16x1xi32> to vector<16x128xi32>
    %11 = arith.cmpi eq, %1, %10 : vector<16x128xi32>
    %12 = arith.ori %8, %11 : vector<16x128xi1>
    %13 = arith.extui %12 : vector<16x128xi1> to vector<16x128xi32>
    %14 = arith.sitofp %13 : vector<16x128xi32> to vector<16x128xf32>
    %15 = arith.truncf %14 : vector<16x128xf32> to vector<16x128xbf16>
    %c0_1 = arith.constant 0 : index
    %c0_2 = arith.constant 0 : index
    %16 = vector.load %arg2[%c0_1, %c0_2] : memref<128x128xbf16, #tpu.memory_space<vmem>>, vector<128x128xbf16>
    %cst = arith.constant dense<0.000000e+00> : vector<16x128xf32>
    %17 = tpu.matmul %15, %16, %cst {dimension_numbers = #tpu.dot_dimension_numbers<[1], [0], [0], [1], [0, 0, 1, 1], [], []>} : vector<16x128xbf16>, vector<128x128xbf16>, vector<16x128xf32> -> vector<16x128xf32>
    %c0_3 = arith.constant 0 : index
    %c0_4 = arith.constant 0 : index
    %18 = vector.load %arg3[%c0_3, %c0_4] : memref<16x128xf32, #tpu.memory_space<vmem>>, vector<16x128xf32>
    %19 = arith.addf %17, %18 : vector<16x128xf32>
    %c0_5 = arith.constant 0 : index
    %c0_6 = arith.constant 0 : index
    %20 = vector.load %arg4[%c0_5, %c0_6] : memref<16x128xf32, #tpu.memory_space<vmem>>, vector<16x128xf32>
    tpu.vector_store %arg4[%c0_5, %c0_6], %19 {strides = array<i32>} : memref<16x128xf32, #tpu.memory_space<vmem>>, vector<16x128xf32>,
    return
  }
  func.func @transform_0(%arg0: i32) -> (i32, i32) {
    %c0_i32 = arith.constant 0 : i32
    %c0_i32_0 = arith.constant 0 : i32
    return %arg0, %c0_i32 : i32, i32
  }
  func.func @transform_1(%arg0: i32) -> (i32, i32) {
    %c0_i32 = arith.constant 0 : i32
    %c0_i32_0 = arith.constant 0 : i32
    %c0_i32_1 = arith.constant 0 : i32
    return %c0_i32, %c0_i32_0 : i32, i32
  }
  func.func @transform_2(%arg0: i32) -> (i32, i32) {
    %c0_i32 = arith.constant 0 : i32
    %c0_i32_0 = arith.constant 0 : i32
    %c0_i32_1 = arith.constant 0 : i32
    return %c0_i32, %c0_i32_0 : i32, i32
  }
  func.func @transform_3(%arg0: i32) -> (i32, i32) {
    %c0_i32 = arith.constant 0 : i32
    %c0_i32_0 = arith.constant 0 : i32
    return %arg0, %c0_i32 : i32, i32
  }
}

</mosaic_0001>

<llo_original>
// kernel: bottom_embedding.1
$region0: #{bottom_embedding.1}
  #allocation0 [shape = 'u32[]', space=smem, size = 0x4, offset = 0x4, fixed_abs, tag = 'smem constant byte address 0x4 - core index']
  #allocation1 [shape = 'u32[144,128]{1,0:T(1,128)}', space=vmem, size = 0x12000, scoped, tag = 'internal scratch']
  %s0 = inlined_call_operand.vmem [shape: s32[32,3], index: 0, kind: input, shape index: {}]
  %s1 = inlined_call_operand.vmem [shape: bf16[128,128], index: 1, kind: input, shape index: {}]
  %s2 = inlined_call_operand.vmem [shape: f32[16,128], index: 2, kind: input, shape index: {}]
  %s3 = inlined_call_operand.vmem [shape: f32[32,128], index: 3, kind: output, shape index: {}]
  %s4 = sld [smem:[#allocation0]]
  $region45: #{bottom_embedding.1} parent=0
    _
  %s6 = ssub.s32 1, %s4
  %s7 = scalar_select 0, %s6, %s4
  loop: start=0, step=1, limit=4
  $region2: #{bottom_embedding.1} parent=0 // loop_pre_header
    _
  $region3: #{bottom_embedding.1} parent=0 // loop_header
    %s9 = sphi 0, %s13
    %p10 = scmp.ge.s32.totalorder %s9, 4
    %s19 = sphi 0, %s21
    %s22 = sphi 0, %s19
    %s23 = sphi 0, %s22
    %s39 = sphi 0, %s23
    %s43 = sphi 0, %s43
    %s45 = sphi 0, %s43
    %s46 = sphi 0, %s45
    %s60 = sphi 0, %s46
    %s64 = sphi 0, %s64
    %s66 = sphi 0, %s64
    %s67 = sphi 0, %s66
    %s81 = sphi 0, %s67
    %s87 = sphi 0, %s89
    %s90 = sphi 0, %s87
    %s91 = sphi 0, %s90
    %s107 = sphi 0, %s91
  $region4: #{bottom_embedding.1} parent=0 // loop_header_branch
    %12 = sbr.rel (%p10) target = $region8
  $region5: #{bottom_embedding.1} parent=0 // loop_body
    %s14 = ssub.s32 %s9, 1
    %s15 = ssub.s32 %s9, 2
    %s16 = sadd.s32 %s9, 1
    %s17 = ssub.s32 %s9, %s16
    %p18 = scmp.eq.s32.totalorder %s17, 0
    %s20 = sadd.s32 %s19, 1
    %s21 = scalar_select %p18, %s19, %s20
    %p24 = pneg %p18
    %p25 = scmp.eq.s32.totalorder %s9, 1
    %p26 = por %p24, %p25
    %p27 = scmp.ne.s32.totalorder %s19, %s22
    %p28 = scmp.eq.s32.totalorder %s9, 0
    %p29 = por %p27, %p28
    %p30 = scmp.ne.s32.totalorder %s19, %s22
    %p31 = scmp.eq.s32.totalorder %s14, 1
    %p32 = por %p30, %p31
    %p33 = scmp.ne.s32.totalorder %s22, %s23
    %p34 = scmp.eq.s32.totalorder %s14, 0
    %p35 = por %p33, %p34
    %p36 = scmp.ne.s32.totalorder %s22, %s23
    %p37 = scmp.eq.s32.totalorder %s15, 1
    %p38 = por %p36, %p37
    %p40 = scmp.ne.s32.totalorder %s23, %s39
    %p41 = scmp.eq.s32.totalorder %s15, 0
    %p42 = por %p40, %p41
    %s44 = sadd.s32 %s43, 1
    %p47 = scmp.eq.s32.totalorder %s9, 1
    %p48 = scmp.ne.s32.totalorder %s43, %s45
    %p49 = scmp.eq.s32.totalorder %s9, 0
    %p50 = por %p48, %p49
    %p51 = scmp.ne.s32.totalorder %s43, %s45
    %p52 = scmp.eq.s32.totalorder %s14, 1
    %p53 = por %p51, %p52
    %p54 = scmp.ne.s32.totalorder %s45, %s46
    %p55 = scmp.eq.s32.totalorder %s14, 0
    %p56 = por %p54, %p55
    %p57 = scmp.ne.s32.totalorder %s45, %s46
    %p58 = scmp.eq.s32.totalorder %s15, 1
    %p59 = por %p57, %p58
    %p61 = scmp.ne.s32.totalorder %s46, %s60
    %p62 = scmp.eq.s32.totalorder %s15, 0
    %p63 = por %p61, %p62
    %s65 = sadd.s32 %s64, 1
    %p68 = scmp.eq.s32.totalorder %s9, 1
    %p69 = scmp.ne.s32.totalorder %s64, %s66
    %p70 = scmp.eq.s32.totalorder %s9, 0
    %p71 = por %p69, %p70
    %p72 = scmp.ne.s32.totalorder %s64, %s66
    %p73 = scmp.eq.s32.totalorder %s14, 1
    %p74 = por %p72, %p73
    %p75 = scmp.ne.s32.totalorder %s66, %s67
    %p76 = scmp.eq.s32.totalorder %s14, 0
    %p77 = por %p75, %p76
    %p78 = scmp.ne.s32.totalorder %s66, %s67
    %p79 = scmp.eq.s32.totalorder %s15, 1
    %p80 = por %p78, %p79
    %p82 = scmp.ne.s32.totalorder %s67, %s81
    %p83 = scmp.eq.s32.totalorder %s15, 0
    %p84 = por %p82, %p83
    %s85 = ssub.s32 %s9, %s16
    %p86 = scmp.eq.s32.totalorder %s85, 0
    %s88 = sadd.s32 %s87, 1
    %s89 = scalar_select %p86, %s87, %s88
    %p92 = pneg %p86
    %p93 = scmp.eq.s32.totalorder %s9, 1
    %p94 = por %p92, %p93
    %p95 = scmp.ne.s32.totalorder %s87, %s90
    %p96 = scmp.eq.s32.totalorder %s9, 0
    %p97 = por %p95, %p96
    %p98 = scmp.ne.s32.totalorder %s87, %s90
    %p99 = scmp.eq.s32.totalorder %s14, 1
    %p100 = por %p98, %p99
    %p101 = scmp.ne.s32.totalorder %s90, %s91
    %p102 = scmp.eq.s32.totalorder %s14, 0
    %p103 = por %p101, %p102
    %p104 = scmp.ne.s32.totalorder %s90, %s91
    %p105 = scmp.eq.s32.totalorder %s15, 1
    %p106 = por %p104, %p105
    %p108 = scmp.ne.s32.totalorder %s91, %s107
    %p109 = scmp.eq.s32.totalorder %s15, 0
    %p110 = por %p108, %p109
    %p111 = scmp.le.s32.totalorder 1, %s9
    %p112 = scmp.lt.s32.totalorder %s9, 3
    %p113 = pnand %p111, %p112
    %p114 = pneg %p113
    // Predicated region
    $region9: #{bottom_embedding.1} parent=5 // pred_check
      _
    $region10: #{bottom_embedding.1} parent=5 // pred_check_branch
      %116 = sbr.rel (%p113) target = $region12
    $region11: #{bottom_embedding.1} parent=5 // pred_region
      %s117 = ssub.s32 %s9, 1
      // Predicated region
      $region13: #{bottom_embedding.1} parent=11 // pred_check
        %p118 = pneg %p56
      $region14: #{bottom_embedding.1} parent=11 // pred_check_branch
        %120 = sbr.rel (%p118) target = $region16
      $region15: #{bottom_embedding.1} parent=11 // pred_region
        _
      $region16: #{bottom_embedding.1} parent=11 // pred_fallthru
        _
      // Predicated region
      $region17: #{bottom_embedding.1} parent=11 // pred_check
        %p121 = pneg %p77
      $region18: #{bottom_embedding.1} parent=11 // pred_check_branch
        %123 = sbr.rel (%p121) target = $region20
      $region19: #{bottom_embedding.1} parent=11 // pred_region
        _
      $region20: #{bottom_embedding.1} parent=11 // pred_fallthru
        _
    $region12: #{bottom_embedding.1} parent=5 // pred_fallthru
      _
    %p124 = scmp.lt.s32.totalorder %s9, 2
    // Predicated region
    $region21: #{bottom_embedding.1} parent=5 // pred_check
      %p125 = pneg %p124
    $region22: #{bottom_embedding.1} parent=5 // pred_check_branch
      %127 = sbr.rel (%p125) target = $region24
    $region23: #{bottom_embedding.1} parent=5 // pred_region
      // Predicated region
      $region25: #{bottom_embedding.1} parent=23 // pred_check
        %p128 = pneg %p29
      $region26: #{bottom_embedding.1} parent=23 // pred_check_branch
        %130 = sbr.rel (%p128) target = $region28
      $region27: #{bottom_embedding.1} parent=23 // pred_region
        %s131 = smul.u32 2, %s9
        %p132 = scmp.lt.s32.totalorder %s131, 3
        %s133 = scalar_select %p132, %s131, 3
        %s134 = smul.addr %s133, 8
        %s135 = scalar_lea.vmem %s0, %s134
        %s136 = smul.u32 2, %s9
      $region28: #{bottom_embedding.1} parent=23 // pred_fallthru
        _
    $region24: #{bottom_embedding.1} parent=5 // pred_fallthru
      _
    %p137 = scmp.le.s32.totalorder 1, %s9
    %p138 = scmp.lt.s32.totalorder %s9, 3
    %p139 = pnand %p137, %p138
    %p140 = pneg %p139
    // Predicated region
    $region29: #{bottom_embedding.1} parent=5 // pred_check
      _
    $region30: #{bottom_embedding.1} parent=5 // pred_check_branch
      %142 = sbr.rel (%p139) target = $region32
    $region31: #{bottom_embedding.1} parent=5 // pred_region
      %s143 = ssub.s32 %s9, 1
      %s144 = smul.u32 2, %s14
      %p145 = scmp.lt.s32.totalorder %s144, 3
      %s146 = scalar_select %p145, %s144, 3
      %s147 = smul.addr %s146, 8
      %s148 = scalar_lea.vmem %s0, %s147
      %p149 = pneg %p35
      %p150 = pneg %p32
      %p151 = pneg %p56
      %p152 = pneg %p53
      %p153 = pneg %p77
      %p154 = pneg %p74
      %p155 = pneg %p103
      %p156 = pneg %p100
      %s157 = smul.u32 2, %s14
      %p158 = scmp.lt.s32.totalorder %s157, 3
      %s159 = scalar_select %p158, %s157, 3
      %s160 = smul.addr %s159, 8
      %s161 = scalar_lea.vmem %s3, %s160
      %s162 = smul.u32 2, %s14
      %p163 = scmp.lt.s32.totalorder %s162, 3
      %s164 = scalar_select %p163, %s162, 3
      %s165 = smul.addr %s164, 8
      %s166 = scalar_lea.vmem %s0, %s165
      %s167 = smul.u32 2, %s14
      %s168 = smul.u32 2, %s14
      %p169 = scmp.lt.s32.totalorder %s168, 3
      %s170 = scalar_select %p169, %s168, 3
      %s171 = smul.addr %s170, 8
      %s172 = scalar_lea.vmem %s3, %s171
      %s173 = smul.u32 2, %s14
      %v175 = vld [vmem:[%s166] sm:$0xff]
      %v176 = vld [vmem:[%s166 + $0x8] sm:$0xff]
      %v177 = vlaneseq
      %v178 = vand.u32 %v177, 127
      %179 = vset.pattern.permute.xlu0 0
      %180 = vperm.xlu0 %179, %v175
      %v181 = vpop.permute.xlu0 %180
      %182 = vset.pattern.permute.xlu0 0
      %183 = vperm.xlu0 %182, %v176
      %v184 = vpop.permute.xlu0 %183
      %vm185 = vcmp.eq.s32.totalorder %v178, %v181
      %vm186 = vcmp.eq.s32.totalorder %v178, %v184
      %187 = vset.pattern.permute.xlu0 1
      %188 = vperm.xlu0 %187, %v175
      %v189 = vpop.permute.xlu0 %188
      %190 = vset.pattern.permute.xlu0 1
      %191 = vperm.xlu0 %190, %v176
      %v192 = vpop.permute.xlu0 %191
      %vm193 = vcmp.eq.s32.totalorder %v178, %v189
      %vm194 = vcmp.eq.s32.totalorder %v178, %v192
      %vm195 = vmor %vm185, %vm193
      %vm196 = vmor %vm186, %vm194
      %197 = vset.pattern.permute.xlu0 2
      %198 = vperm.xlu0 %197, %v175
      %v199 = vpop.permute.xlu0 %198
      %200 = vset.pattern.permute.xlu0 2
      %201 = vperm.xlu0 %200, %v176
      %v202 = vpop.permute.xlu0 %201
      %vm203 = vcmp.eq.s32.totalorder %v178, %v199
      %vm204 = vcmp.eq.s32.totalorder %v178, %v202
      %vm205 = vmor %vm195, %vm203
      %vm206 = vmor %vm196, %vm204
      %v207 = vsel %vm205, 1, 0
      %v208 = vsel %vm206, 1, 0
      %v209 = vcvt.s32.f32 %v207
      %v210 = vcvt.s32.f32 %v208
      %v211 = vpack.c.bf16 %v210, %v209
      %v212 = vld [vmem:[%s1] sm:$0xf]
      %v213 = vld [vmem:[%s1 + $0x4] sm:$0xf]
      %v214 = vld [vmem:[%s1 + $0x8] sm:$0xf]
      %v215 = vld [vmem:[%s1 + $0xc] sm:$0xf]
      %v216 = vld [vmem:[%s1 + $0x10] sm:$0xf]
      %v217 = vld [vmem:[%s1 + $0x14] sm:$0xf]
      %v218 = vld [vmem:[%s1 + $0x18] sm:$0xf]
      %v219 = vld [vmem:[%s1 + $0x1c] sm:$0xf]
      %v220 = vld [vmem:[%s1 + $0x20] sm:$0xf]
      %v221 = vld [vmem:[%s1 + $0x24] sm:$0xf]
      %v222 = vld [vmem:[%s1 + $0x28] sm:$0xf]
      %v223 = vld [vmem:[%s1 + $0x2c] sm:$0xf]
      %v224 = vld [vmem:[%s1 + $0x30] sm:$0xf]
      %v225 = vld [vmem:[%s1 + $0x34] sm:$0xf]
      %v226 = vld [vmem:[%s1 + $0x38] sm:$0xf]
      %v227 = vld [vmem:[%s1 + $0x3c] sm:$0xf]
      %v228 = vld [vmem:[%s2] sm:$0xff]
      %v229 = vld [vmem:[%s2 + $0x8] sm:$0xff]
      %v246 = vunpack.c.l.b16 %v212
      %v247 = vunpack.c.l.b16 %v213
      %v248 = vunpack.c.l.b16 %v214
      %v249 = vunpack.c.l.b16 %v215
      %v250 = vunpack.c.l.b16 %v216
      %v251 = vunpack.c.l.b16 %v217
      %v252 = vunpack.c.l.b16 %v218
      %v253 = vunpack.c.l.b16 %v219
      %v254 = vunpack.c.l.b16 %v220
      %v255 = vunpack.c.l.b16 %v221
      %v256 = vunpack.c.l.b16 %v222
      %v257 = vunpack.c.l.b16 %v223
      %v258 = vunpack.c.l.b16 %v224
      %v259 = vunpack.c.l.b16 %v225
      %v260 = vunpack.c.l.b16 %v226
      %v261 = vunpack.c.l.b16 %v227
      %v262 = vpack.c.b16 %v247, %v246
      %v263 = vpack.c.b16 %v249, %v248
      %v264 = vpack.c.b16 %v251, %v250
      %v265 = vpack.c.b16 %v253, %v252
      %v266 = vpack.c.b16 %v255, %v254
      %v267 = vpack.c.b16 %v257, %v256
      %v268 = vpack.c.b16 %v259, %v258
      %v269 = vpack.c.b16 %v261, %v260
      %278 = vmatprep.subr.bf16.mxu0 0
      %279 = vmatpush1.bf16.msra.mxu0 %v269
      %280 = vmatprep.subr.bf16.mxu0 0
      %281 = vmatpush1.bf16.msra.mxu0 %v268
      %282 = vmatprep.subr.bf16.mxu0 0
      %283 = vmatpush1.bf16.msra.mxu0 %v267
      %284 = vmatprep.subr.bf16.mxu0 0
      %285 = vmatpush1.bf16.msra.mxu0 %v266
      %286 = vmatprep.subr.bf16.mxu0 0
      %287 = vmatpush1.bf16.msra.mxu0 %v265
      %288 = vmatprep.subr.bf16.mxu0 0
      %289 = vmatpush1.bf16.msra.mxu0 %v264
      %290 = vmatprep.subr.bf16.mxu0 0
      %291 = vmatpush1.bf16.msra.mxu0 %v263
      %292 = vmatprep.subr.bf16.mxu0 0
      %293 = vmatpush1.bf16.msra.mxu0 %v262
      %294 = vmatprep.subr.bf16.mxu0 0
      %295 = vmatpush2.bf16.msra.mxu0 0
      %296 = vmatprep.subr.bf16.mxu0 0
      %297 = vmatpush2.bf16.msra.mxu0 0
      %298 = vmatprep.subr.bf16.mxu0 0
      %299 = vmatpush2.bf16.msra.mxu0 0
      %300 = vmatprep.subr.bf16.mxu0 0
      %301 = vmatpush2.bf16.msra.mxu0 0
      %302 = vmatprep.subr.bf16.mxu0 0
      %303 = vmatpush2.bf16.msra.mxu0 0
      %304 = vmatprep.subr.bf16.mxu0 0
      %305 = vmatpush2.bf16.msra.mxu0 0
      %306 = vmatprep.subr.bf16.mxu0 0
      %307 = vmatpush2.bf16.msra.mxu0 0
      %308 = vmatprep.subr.bf16.mxu0 0
      %309 = vmatpush2.bf16.msra.mxu0 0
      %310 = vmatprep.mubr.bf16.mxu0 0
      %311 = vmatmul.mubr.bf16.gmra.mxu0 %v211
      %v312 = vpop.f32.mrf.mxu0
      %v313 = vadd.f32 %v228, %v312
      %v314 = vpop.f32.mrf.mxu0
      %v315 = vpop.f32.mrf.mxu0
      %v316 = vadd.f32 %v229, %v315
      %v317 = vpop.f32.mrf.mxu0
      %318 = vdwg.mxu0
      %319 = vst [vmem:[%s172] sm:$0xff] %v313
      %320 = vst [vmem:[%s172 + $0x8] sm:$0xff] %v316
      %s321 = smul.u32 2, %s14
      %p322 = scmp.lt.s32.totalorder %s321, 3
      %s323 = scalar_select %p322, %s321, 3
      %s324 = smul.addr %s323, 8
      %s325 = scalar_lea.vmem %s3, %s324
      // Predicated region
      $region33: #{bottom_embedding.1} parent=31 // pred_check
        %p326 = pneg %p100
      $region34: #{bottom_embedding.1} parent=31 // pred_check_branch
        %328 = sbr.rel (%p326) target = $region36
      $region35: #{bottom_embedding.1} parent=31 // pred_region
        %s329 = smul.u32 2, %s14
      $region36: #{bottom_embedding.1} parent=31 // pred_fallthru
        _
    $region32: #{bottom_embedding.1} parent=5 // pred_fallthru
      _
    %p330 = scmp.le.s32.totalorder 2, %s9
    // Predicated region
    $region37: #{bottom_embedding.1} parent=5 // pred_check
      %p331 = pneg %p330
    $region38: #{bottom_embedding.1} parent=5 // pred_check_branch
      %333 = sbr.rel (%p331) target = $region40
    $region39: #{bottom_embedding.1} parent=5 // pred_region
      %s334 = ssub.s32 %s9, 2
      // Predicated region
      $region41: #{bottom_embedding.1} parent=39 // pred_check
        %p335 = pneg %p106
      $region42: #{bottom_embedding.1} parent=39 // pred_check_branch
        %337 = sbr.rel (%p335) target = $region44
      $region43: #{bottom_embedding.1} parent=39 // pred_region
        %s338 = smul.u32 2, %s15
        %p339 = scmp.lt.s32.totalorder %s338, 3
        %s340 = scalar_select %p339, %s338, 3
        %s341 = smul.addr %s340, 8
        %s342 = scalar_lea.vmem %s3, %s341
      $region44: #{bottom_embedding.1} parent=39 // pred_fallthru
        _
    $region40: #{bottom_embedding.1} parent=5 // pred_fallthru
      _
  $region6: #{bottom_embedding.1} parent=0 // loop_footer
    %s13 = sadd.s32 1, %s9
  $region7: #{bottom_embedding.1} parent=0 // loop_footer_branch
    %8 = sbr.rel target = $region3
  $region8: #{bottom_embedding.1} parent=0 // loop_exit
    _

</llo_original>
